<compile_context>
chip_gen: v5e
topology: v5e:2x2
jax: 0.10.0
libtpu: 0.0.40
codegen_flags: <defaults>
</compile_context>

<pallas_src>
import functools

import jax
import jax.numpy as jnp
from jax.experimental import pallas as pl
from jax.experimental.pallas import tpu as pltpu


def _ss_loss_kernel(*refs, alpha, total, block_m, lane, has_weights, needs_mask):
    if has_weights:
        (x_ref, t_ref, w_ref, out_ref,
         acc_s_num, acc_s_den, acc_p_num, acc_p_den) = refs
    else:
        (x_ref, t_ref, out_ref,
         acc_s_num, acc_s_den, acc_p_num, acc_p_den) = refs

    i = pl.program_id(0)

    # Init the four vector accumulators on the first grid step.
    @pl.when(i == 0)
    def _():
        acc_s_num[...] = jnp.zeros_like(acc_s_num)
        acc_s_den[...] = jnp.zeros_like(acc_s_den)
        acc_p_num[...] = jnp.zeros_like(acc_p_num)
        acc_p_den[...] = jnp.zeros_like(acc_p_den)

    x = x_ref[...].astype(jnp.float32)
    t = t_ref[...].astype(jnp.float32)

    mask = None
    if needs_mask:
        # Mask out padded / out-of-range elements of the (M, L) slab.
        row = jax.lax.broadcasted_iota(jnp.int32, (block_m, lane), 0)
        col = jax.lax.broadcasted_iota(jnp.int32, (block_m, lane), 1)
        gidx = (i * block_m + row) * lane + col
        mask = gidx < total
        x = jnp.where(mask, x, 0.0)
        t = jnp.where(mask, t, 0.0)

    if has_weights:
        w = w_ref[...].astype(jnp.float32)
        if needs_mask:
            w = jnp.where(mask, w, 0.0)
        xw = x * w                     # inputs = inputs * weights
        bg = (1.0 - t) * w             # (1 - targets) * weights
    else:
        xw = x                         # weights == 1
        bg = 1.0 - t
        if needs_mask:
            bg = jnp.where(mask, bg, 0.0)

    diff2 = (xw - t) * (xw - t)        # (input_flat - targets_flat) ** 2

    def block_reduce(q):
        # (block_m, lane) -> (block_m//8, 8, lane) is a pure leading-dim split
        # (layout-free); the axis-0 sum is plain vreg-wise VALU adds (no XLU).
        return q.reshape(block_m // 8, 8, lane).sum(axis=0)

    acc_s_num[...] += block_reduce(diff2 * t)   # sensitivity numerator
    acc_s_den[...] += block_reduce(t)           # sensitivity denominator
    acc_p_num[...] += block_reduce(diff2 * bg)  # specificity numerator
    acc_p_den[...] += block_reduce(bg)          # specificity denominator

    # Finalize on the last grid step: single cross-lane reduce + scalar math.
    @pl.when(i == pl.num_programs(0) - 1)
    def _():
        smooth = 1e-05
        sens = jnp.sum(acc_s_num[...]) / (jnp.sum(acc_s_den[...]) + smooth)
        spec = jnp.sum(acc_p_num[...]) / (jnp.sum(acc_p_den[...]) + smooth)
        out_ref[0, 0] = alpha * sens + (1.0 - alpha) * spec


def sensitivity_specificity_loss(inputs, targets, weights=None, alpha_sen=0.6):
    has_weights = weights is not None

    # Flatten to 1-D in native dtype (no wrapper-side astype, no ones array).
    x = inputs.reshape(-1)
    t = targets.reshape(-1)
    w = weights.reshape(-1) if has_weights else None
    total = x.shape[0]

    # Lane width: largest of these that divides the element count (so the
    # reshape is a free view); otherwise fall back to 512 + a one-time pad.
    lane = 512
    for cand in (512, 256, 128):
        if total % cand == 0:
            lane = cand
            break

    m = pl.cdiv(total, lane)
    if m < 8:
        m = 8                                  # at least one full (8, lane) tile
    block_m = min(512, 8 * (m // 8))           # ~1 MiB f32 blocks, multiple of 8
    total_pad = m * lane
    needs_mask = (total_pad != total) or (m % block_m != 0)

    if total_pad != total:
        # Rare path (element count not lane-aligned); in-kernel mask keeps it exact.
        x = jnp.pad(x, (0, total_pad - total))
        t = jnp.pad(t, (0, total_pad - total))
        if has_weights:
            w = jnp.pad(w, (0, total_pad - total))

    x = x.reshape(m, lane)
    t = t.reshape(m, lane)
    if has_weights:
        w = w.reshape(m, lane)

    grid = (pl.cdiv(m, block_m),)
    in_spec = pl.BlockSpec((block_m, lane), lambda i: (i, 0))
    in_specs = [in_spec, in_spec] + ([in_spec] if has_weights else [])
    operands = (x, t, w) if has_weights else (x, t)

    kernel = functools.partial(
        _ss_loss_kernel,
        alpha=float(alpha_sen),
        total=total,
        block_m=block_m,
        lane=lane,
        has_weights=has_weights,
        needs_mask=needs_mask,
    )

    out = pl.pallas_call(
        kernel,
        out_shape=jax.ShapeDtypeStruct((1, 1), jnp.float32),
        grid_spec=pltpu.PrefetchScalarGridSpec(
            num_scalar_prefetch=0,
            grid=grid,
            in_specs=in_specs,
            out_specs=pl.BlockSpec((1, 1), lambda i: (0, 0),
                                   memory_space=pltpu.SMEM),
            scratch_shapes=[pltpu.VMEM((8, lane), jnp.float32)
                            for _ in range(4)],
        ),
        compiler_params=pltpu.CompilerParams(
            dimension_semantics=("arbitrary",),
            vmem_limit_bytes=32 * 1024 * 1024,
        ),
    )(*operands)
    return out[0, 0]


def _reference_loss(inputs, targets, weights=None, alpha_sen=0.6):
    # Pure-JAX reference mirroring the PyTorch module exactly.
    if weights is None:
        weights = jnp.ones_like(targets)
    inputs = inputs * weights
    n = targets.shape[0]
    smooth = 1e-05
    x = inputs.reshape(n, -1)
    t = targets.reshape(n, -1)
    bg = ((1 - targets) * weights).reshape(n, -1)
    sens = jnp.sum((x - t) ** 2 * t) / (jnp.sum(t) + smooth)
    spec = jnp.sum((x - t) ** 2 * bg) / (jnp.sum(bg) + smooth)
    return alpha_sen * sens + (1 - alpha_sen) * spec


if __name__ == "__main__":
    key = jax.random.PRNGKey(0)
    k1, k2, k3 = jax.random.split(key, 3)

    # NCHW inputs, small shapes.
    N, C, H, W = 2, 4, 16, 16
    inputs = jax.nn.sigmoid(jax.random.normal(k1, (N, C, H, W), jnp.float32))
    targets = (jax.random.uniform(k2, (N, C, H, W)) > 0.5).astype(jnp.float32)
    weights = jax.random.uniform(k3, (N, C, H, W), jnp.float32)

    # Default-weights path (weights=None, specialized kernel) and weighted path.
    loss_default = sensitivity_specificity_loss(inputs, targets, None, 0.6)
    loss_weighted = sensitivity_specificity_loss(inputs, targets, weights, 0.6)
    jax.block_until_ready(loss_default)
    jax.block_until_ready(loss_weighted)

    ref_default = _reference_loss(inputs, targets, None, 0.6)
    ref_weighted = _reference_loss(inputs, targets, weights, 0.6)

    assert jnp.allclose(loss_default, ref_default, rtol=1e-5, atol=1e-6)
    assert jnp.allclose(loss_weighted, ref_weighted, rtol=1e-5, atol=1e-6)

    print("KERNEL_OK")
</pallas_src>

<mosaic_0001>
module attributes {stable_mosaic.version = 11 : i64} {
  func.func @_ss_loss_kernel(%arg0: i32, %arg1: memref<8x512xf32, #tpu.memory_space<vmem>>, %arg2: memref<8x512xf32, #tpu.memory_space<vmem>>, %arg3: memref<1x1xf32, #tpu.memory_space<smem>>, %arg4: memref<8x512xf32, #tpu.memory_space<vmem>>, %arg5: memref<8x512xf32, #tpu.memory_space<vmem>>, %arg6: memref<8x512xf32, #tpu.memory_space<vmem>>, %arg7: memref<8x512xf32, #tpu.memory_space<vmem>>) attributes {dimension_semantics = [#tpu.dimension_semantics<arbitrary>], iteration_bounds = array<i64: 1>, scalar_prefetch = 0 : i64, scratch_operands = 4 : i64, tpu.core_type = #tpu.core_type<tc>, window_params = [{transform_indices = @transform_0, window_bounds = array<i64: 8, 512>}, {transform_indices = @transform_1, window_bounds = array<i64: 8, 512>}, {transform_indices = @transform_2, window_bounds = array<i64: 1, 1>}]} {
    %c0_i32 = arith.constant 0 : i32
    %0 = arith.cmpi eq, %arg0, %c0_i32 : i32
    %1 = arith.extui %0 : i1 to i32
    %c0_i32_0 = arith.constant 0 : i32
    %2 = arith.cmpi ne, %1, %c0_i32_0 : i32
    scf.if %2 {
      %cst_29 = arith.constant 0.000000e+00 : f32
      %51 = vector.broadcast %cst_29 : f32 to vector<8x512xf32>
      %c0_30 = arith.constant 0 : index
      %c0_31 = arith.constant 0 : index
      %52 = vector.load %arg4[%c0_30, %c0_31] : memref<8x512xf32, #tpu.memory_space<vmem>>, vector<8x512xf32>
      tpu.vector_store %arg4[%c0_30, %c0_31], %51 {strides = array<i32>} : memref<8x512xf32, #tpu.memory_space<vmem>>, vector<8x512xf32>,
      %cst_32 = arith.constant 0.000000e+00 : f32
      %53 = vector.broadcast %cst_32 : f32 to vector<8x512xf32>
      %c0_33 = arith.constant 0 : index
      %c0_34 = arith.constant 0 : index
      %54 = vector.load %arg5[%c0_33, %c0_34] : memref<8x512xf32, #tpu.memory_space<vmem>>, vector<8x512xf32>
      tpu.vector_store %arg5[%c0_33, %c0_34], %53 {strides = array<i32>} : memref<8x512xf32, #tpu.memory_space<vmem>>, vector<8x512xf32>,
      %cst_35 = arith.constant 0.000000e+00 : f32
      %55 = vector.broadcast %cst_35 : f32 to vector<8x512xf32>
      %c0_36 = arith.constant 0 : index
      %c0_37 = arith.constant 0 : index
      %56 = vector.load %arg6[%c0_36, %c0_37] : memref<8x512xf32, #tpu.memory_space<vmem>>, vector<8x512xf32>
      tpu.vector_store %arg6[%c0_36, %c0_37], %55 {strides = array<i32>} : memref<8x512xf32, #tpu.memory_space<vmem>>, vector<8x512xf32>,
      %cst_38 = arith.constant 0.000000e+00 : f32
      %57 = vector.broadcast %cst_38 : f32 to vector<8x512xf32>
      %c0_39 = arith.constant 0 : index
      %c0_40 = arith.constant 0 : index
      %58 = vector.load %arg7[%c0_39, %c0_40] : memref<8x512xf32, #tpu.memory_space<vmem>>, vector<8x512xf32>
      tpu.vector_store %arg7[%c0_39, %c0_40], %57 {strides = array<i32>} : memref<8x512xf32, #tpu.memory_space<vmem>>, vector<8x512xf32>,
    } else {
    }
    %c0 = arith.constant 0 : index
    %c0_1 = arith.constant 0 : index
    %3 = vector.load %arg1[%c0, %c0_1] : memref<8x512xf32, #tpu.memory_space<vmem>>, vector<8x512xf32>
    %c0_2 = arith.constant 0 : index
    %c0_3 = arith.constant 0 : index
    %4 = vector.load %arg2[%c0_2, %c0_3] : memref<8x512xf32, #tpu.memory_space<vmem>>, vector<8x512xf32>
    %5 = tpu.iota {dimensions = array<i32: 0>} : vector<8x512xi32>
    %6 = tpu.iota {dimensions = array<i32: 1>} : vector<8x512xi32>
    %c8_i32 = arith.constant 8 : i32
    %7 = arith.muli %arg0, %c8_i32 : i32
    %8 = vector.broadcast %7 : i32 to vector<8x512xi32>
    %9 = arith.addi %8, %5 : vector<8x512xi32>
    %c512_i32 = arith.constant 512 : i32
    %10 = vector.broadcast %c512_i32 : i32 to vector<8x512xi32>
    %11 = arith.muli %9, %10 : vector<8x512xi32>
    %12 = arith.addi %11, %6 : vector<8x512xi32>
    %c2048_i32 = arith.constant 2048 : i32
    %13 = vector.broadcast %c2048_i32 : i32 to vector<8x512xi32>
    %14 = arith.cmpi slt, %12, %13 : vector<8x512xi32>
    %cst = arith.constant 0.000000e+00 : f32
    %15 = vector.broadcast %cst : f32 to vector<8x512xf32>
    %16 = arith.select %14, %3, %15 : vector<8x512xi1>, vector<8x512xf32>
    %cst_4 = arith.constant 0.000000e+00 : f32
    %17 = vector.broadcast %cst_4 : f32 to vector<8x512xf32>
    %18 = arith.select %14, %4, %17 : vector<8x512xi1>, vector<8x512xf32>
    %cst_5 = arith.constant 1.000000e+00 : f32
    %19 = vector.broadcast %cst_5 : f32 to vector<8x512xf32>
    %20 = arith.subf %19, %18 : vector<8x512xf32>
    %cst_6 = arith.constant 0.000000e+00 : f32
    %21 = vector.broadcast %cst_6 : f32 to vector<8x512xf32>
    %22 = arith.select %14, %20, %21 : vector<8x512xi1>, vector<8x512xf32>
    %23 = arith.subf %16, %18 : vector<8x512xf32>
    %24 = arith.subf %16, %18 : vector<8x512xf32>
    %25 = arith.mulf %23, %24 : vector<8x512xf32>
    %c0_7 = arith.constant 0 : index
    %c0_8 = arith.constant 0 : index
    %26 = vector.load %arg4[%c0_7, %c0_8] : memref<8x512xf32, #tpu.memory_space<vmem>>, vector<8x512xf32>
    %27 = arith.mulf %25, %18 : vector<8x512xf32>
    %28 = vector.shape_cast %27 : vector<8x512xf32> to vector<1x8x512xf32>
    %cst_9 = arith.constant dense<0.000000e+00> : vector<8x512xf32>
    %29 = vector.multi_reduction <add>, %28, %cst_9 [0] : vector<1x8x512xf32> to vector<8x512xf32>
    %30 = arith.addf %26, %29 : vector<8x512xf32>
    %c0_10 = arith.constant 0 : index
    %c0_11 = arith.constant 0 : index
    %31 = vector.load %arg4[%c0_10, %c0_11] : memref<8x512xf32, #tpu.memory_space<vmem>>, vector<8x512xf32>
    tpu.vector_store %arg4[%c0_10, %c0_11], %30 {strides = array<i32>} : memref<8x512xf32, #tpu.memory_space<vmem>>, vector<8x512xf32>,
    %c0_12 = arith.constant 0 : index
    %c0_13 = arith.constant 0 : index
    %32 = vector.load %arg5[%c0_12, %c0_13] : memref<8x512xf32, #tpu.memory_space<vmem>>, vector<8x512xf32>
    %33 = vector.shape_cast %18 : vector<8x512xf32> to vector<1x8x512xf32>
    %cst_14 = arith.constant dense<0.000000e+00> : vector<8x512xf32>
    %34 = vector.multi_reduction <add>, %33, %cst_14 [0] : vector<1x8x512xf32> to vector<8x512xf32>
    %35 = arith.addf %32, %34 : vector<8x512xf32>
    %c0_15 = arith.constant 0 : index
    %c0_16 = arith.constant 0 : index
    %36 = vector.load %arg5[%c0_15, %c0_16] : memref<8x512xf32, #tpu.memory_space<vmem>>, vector<8x512xf32>
    tpu.vector_store %arg5[%c0_15, %c0_16], %35 {strides = array<i32>} : memref<8x512xf32, #tpu.memory_space<vmem>>, vector<8x512xf32>,
    %c0_17 = arith.constant 0 : index
    %c0_18 = arith.constant 0 : index
    %37 = vector.load %arg6[%c0_17, %c0_18] : memref<8x512xf32, #tpu.memory_space<vmem>>, vector<8x512xf32>
    %38 = arith.mulf %25, %22 : vector<8x512xf32>
    %39 = vector.shape_cast %38 : vector<8x512xf32> to vector<1x8x512xf32>
    %cst_19 = arith.constant dense<0.000000e+00> : vector<8x512xf32>
    %40 = vector.multi_reduction <add>, %39, %cst_19 [0] : vector<1x8x512xf32> to vector<8x512xf32>
    %41 = arith.addf %37, %40 : vector<8x512xf32>
    %c0_20 = arith.constant 0 : index
    %c0_21 = arith.constant 0 : index
    %42 = vector.load %arg6[%c0_20, %c0_21] : memref<8x512xf32, #tpu.memory_space<vmem>>, vector<8x512xf32>
    tpu.vector_store %arg6[%c0_20, %c0_21], %41 {strides = array<i32>} : memref<8x512xf32, #tpu.memory_space<vmem>>, vector<8x512xf32>,
    %c0_22 = arith.constant 0 : index
    %c0_23 = arith.constant 0 : index
    %43 = vector.load %arg7[%c0_22, %c0_23] : memref<8x512xf32, #tpu.memory_space<vmem>>, vector<8x512xf32>
    %44 = vector.shape_cast %22 : vector<8x512xf32> to vector<1x8x512xf32>
    %cst_24 = arith.constant dense<0.000000e+00> : vector<8x512xf32>
    %45 = vector.multi_reduction <add>, %44, %cst_24 [0] : vector<1x8x512xf32> to vector<8x512xf32>
    %46 = arith.addf %43, %45 : vector<8x512xf32>
    %c0_25 = arith.constant 0 : index
    %c0_26 = arith.constant 0 : index
    %47 = vector.load %arg7[%c0_25, %c0_26] : memref<8x512xf32, #tpu.memory_space<vmem>>, vector<8x512xf32>
    tpu.vector_store %arg7[%c0_25, %c0_26], %46 {strides = array<i32>} : memref<8x512xf32, #tpu.memory_space<vmem>>, vector<8x512xf32>,
    %c0_i32_27 = arith.constant 0 : i32
    %48 = arith.cmpi eq, %arg0, %c0_i32_27 : i32
    %49 = arith.extui %48 : i1 to i32
    %c0_i32_28 = arith.constant 0 : i32
    %50 = arith.cmpi ne, %49, %c0_i32_28 : i32
    scf.if %50 {
      %c0_29 = arith.constant 0 : index
      %c0_30 = arith.constant 0 : index
      %51 = vector.load %arg4[%c0_29, %c0_30] : memref<8x512xf32, #tpu.memory_space<vmem>>, vector<8x512xf32>
      %52 = vector.shape_cast %51 : vector<8x512xf32> to vector<1x8x512xf32>
      %cst_31 = arith.constant dense<0.000000e+00> : vector<1xf32>
      %53 = vector.multi_reduction <add>, %52, %cst_31 [1, 2] : vector<1x8x512xf32> to vector<1xf32>
      %54 = vector.shape_cast %53 : vector<1xf32> to vector<1x1x1xf32>
      %55 = vector.extract %54[0, 0, 0] : f32 from vector<1x1x1xf32>
      %c0_32 = arith.constant 0 : index
      %c0_33 = arith.constant 0 : index
      %56 = vector.load %arg5[%c0_32, %c0_33] : memref<8x512xf32, #tpu.memory_space<vmem>>, vector<8x512xf32>
      %57 = vector.shape_cast %56 : vector<8x512xf32> to vector<1x8x512xf32>
      %cst_34 = arith.constant dense<0.000000e+00> : vector<1xf32>
      %58 = vector.multi_reduction <add>, %57, %cst_34 [1, 2] : vector<1x8x512xf32> to vector<1xf32>
      %59 = vector.shape_cast %58 : vector<1xf32> to vector<1x1x1xf32>
      %60 = vector.extract %59[0, 0, 0] : f32 from vector<1x1x1xf32>
      %cst_35 = arith.constant 9.99999974E-6 : f32
      %61 = arith.addf %60, %cst_35 : f32
      %62 = arith.divf %55, %61 : f32
      %c0_36 = arith.constant 0 : index
      %c0_37 = arith.constant 0 : index
      %63 = vector.load %arg6[%c0_36, %c0_37] : memref<8x512xf32, #tpu.memory_space<vmem>>, vector<8x512xf32>
      %64 = vector.shape_cast %63 : vector<8x512xf32> to vector<1x8x512xf32>
      %cst_38 = arith.constant dense<0.000000e+00> : vector<1xf32>
      %65 = vector.multi_reduction <add>, %64, %cst_38 [1, 2] : vector<1x8x512xf32> to vector<1xf32>
      %66 = vector.shape_cast %65 : vector<1xf32> to vector<1x1x1xf32>
      %67 = vector.extract %66[0, 0, 0] : f32 from vector<1x1x1xf32>
      %c0_39 = arith.constant 0 : index
      %c0_40 = arith.constant 0 : index
      %68 = vector.load %arg7[%c0_39, %c0_40] : memref<8x512xf32, #tpu.memory_space<vmem>>, vector<8x512xf32>
      %69 = vector.shape_cast %68 : vector<8x512xf32> to vector<1x8x512xf32>
      %cst_41 = arith.constant dense<0.000000e+00> : vector<1xf32>
      %70 = vector.multi_reduction <add>, %69, %cst_41 [1, 2] : vector<1x8x512xf32> to vector<1xf32>
      %71 = vector.shape_cast %70 : vector<1xf32> to vector<1x1x1xf32>
      %72 = vector.extract %71[0, 0, 0] : f32 from vector<1x1x1xf32>
      %cst_42 = arith.constant 9.99999974E-6 : f32
      %73 = arith.addf %72, %cst_42 : f32
      %74 = arith.divf %67, %73 : f32
      %cst_43 = arith.constant 6.000000e-01 : f32
      %75 = arith.mulf %cst_43, %62 : f32
      %cst_44 = arith.constant 4.000000e-01 : f32
      %76 = arith.mulf %cst_44, %74 : f32
      %77 = arith.addf %75, %76 : f32
      %c0_45 = arith.constant 0 : index
      %c0_46 = arith.constant 0 : index
      %78 = memref.load %arg3[%c0_45, %c0_46] : memref<1x1xf32, #tpu.memory_space<smem>>
      memref.store %77, %arg3[%c0_45, %c0_46] : memref<1x1xf32, #tpu.memory_space<smem>>
    } else {
    }
    return
  }
  func.func @transform_0(%arg0: i32) -> (i32, i32) {
    %c0_i32 = arith.constant 0 : i32
    %c0_i32_0 = arith.constant 0 : i32
    return %arg0, %c0_i32 : i32, i32
  }
  func.func @transform_1(%arg0: i32) -> (i32, i32) {
    %c0_i32 = arith.constant 0 : i32
    %c0_i32_0 = arith.constant 0 : i32
    return %arg0, %c0_i32 : i32, i32
  }
  func.func @transform_2(%arg0: i32) -> (i32, i32) {
    %c0_i32 = arith.constant 0 : i32
    %c0_i32_0 = arith.constant 0 : i32
    %c0_i32_1 = arith.constant 0 : i32
    return %c0_i32, %c0_i32_0 : i32, i32
  }
}

</mosaic_0001>

<llo_original>
// kernel: tpu_custom_call.1
$region0: #{tpu_custom_call.1}
  #allocation0 [shape = 'u32[]', space=smem, size = 0x4, offset = 0x4, fixed_abs, tag = 'smem constant byte address 0x4 - core index']
  #allocation1 [shape = 'u32[72,128]{1,0:T(1,128)}', space=vmem, size = 0x9000, scoped, tag = 'internal scratch']
  #allocation2 [shape = 'f32[8,512]{1,0:T(8,128)}', space=vmem, size = 0x4000, scoped, tag = 'scratch operand']
  #allocation3 [shape = 'f32[8,512]{1,0:T(8,128)}', space=vmem, size = 0x4000, scoped, tag = 'scratch operand']
  #allocation4 [shape = 'f32[8,512]{1,0:T(8,128)}', space=vmem, size = 0x4000, scoped, tag = 'scratch operand']
  #allocation5 [shape = 'f32[8,512]{1,0:T(8,128)}', space=vmem, size = 0x4000, scoped, tag = 'scratch operand']
  %s0 = inlined_call_operand.hbm [shape: f32[8,512], index: 0, kind: input, shape index: {}]
  %s1 = inlined_call_operand.hbm [shape: f32[8,512], index: 1, kind: input, shape index: {}]
  %s2 = inlined_call_operand.hbm [shape: f32[1,1], index: 2, kind: output, shape index: {}]
  %s3 = sld [smem:[#allocation0]]
  $region34: #{tpu_custom_call.1} parent=0
    _
  %s5 = ssub.s32 1, %s3
  %s6 = scalar_select 0, %s5, %s3
  $region1: #{tpu_custom_call.1} parent=0
    #allocation6 [shape = 'u8[16384]{0}', space=vmem, size = 0x4000, scoped, tag = 'input window, operand 0, single buffered']
    #allocation7 [shape = 's32[1]{0}', space=sflag, size = 0x4, scoped, tag = 'scoped memory for tpu_custom_call.1']
    #allocation8 [shape = 's32[1]{0}', space=sflag, size = 0x4, scoped, tag = 'scoped memory for tpu_custom_call.1']
    #allocation9 [shape = 'u8[16384]{0}', space=vmem, size = 0x4000, scoped, tag = 'input window, operand 1, single buffered']
    #allocation10 [shape = 's32[1]{0}', space=sflag, size = 0x4, scoped, tag = 'scoped memory for tpu_custom_call.1']
    #allocation11 [shape = 'u8[512]{0}', space=smem, size = 0x200, scoped, tag = 'output window, operand 0, single buffered']
    %7 = vsyncpa [#allocation7], 0
    %8 = vsyncpa [#allocation10], 0
    %9 = vsyncpa [#allocation8], 0
    // Predicated region
    $region2: #{tpu_custom_call.1} parent=1 // pred_check
      _
    $region3: #{tpu_custom_call.1} parent=1 // pred_check_branch
      %11 = sbr.rel (0) target = $region5
    $region4: #{tpu_custom_call.1} parent=1 // pred_region
      %13 = vsyncadd [#allocation7], 0
      %s15 = sshll.u32 %s0, 4
      %s16 = int_to_ptr.hbm [resolvable:$true] %s15
      %s17 = sshll.u32 [#allocation6], 4
      %s18 = int_to_ptr.vmem [resolvable:$true] %s17
      %20 = dma.hbm_to_vmem [thread:$0]  %s16, 512, %s18, [#allocation7]
    $region5: #{tpu_custom_call.1} parent=1 // pred_fallthru
      _
    // Predicated region
    $region6: #{tpu_custom_call.1} parent=1 // pred_check
      _
    $region7: #{tpu_custom_call.1} parent=1 // pred_check_branch
      %22 = sbr.rel (0) target = $region9
    $region8: #{tpu_custom_call.1} parent=1 // pred_region
      %24 = vsyncadd [#allocation10], 0
      %s26 = sshll.u32 %s1, 4
      %s27 = int_to_ptr.hbm [resolvable:$true] %s26
      %s28 = sshll.u32 [#allocation9], 4
      %s29 = int_to_ptr.vmem [resolvable:$true] %s28
      %31 = dma.hbm_to_vmem [thread:$0]  %s27, 512, %s29, [#allocation10]
    $region9: #{tpu_custom_call.1} parent=1 // pred_fallthru
      _
    // Predicated region
    $region10: #{tpu_custom_call.1} parent=1 // pred_check
      _
    $region11: #{tpu_custom_call.1} parent=1 // pred_check_branch
      %33 = sbr.rel (0) target = $region13
    $region12: #{tpu_custom_call.1} parent=1 // pred_region
      %35 = dma.done [#allocation7], 512
    $region13: #{tpu_custom_call.1} parent=1 // pred_fallthru
      _
    // Predicated region
    $region14: #{tpu_custom_call.1} parent=1 // pred_check
      _
    $region15: #{tpu_custom_call.1} parent=1 // pred_check_branch
      %37 = sbr.rel (0) target = $region17
    $region16: #{tpu_custom_call.1} parent=1 // pred_region
      %39 = dma.done [#allocation10], 512
    $region17: #{tpu_custom_call.1} parent=1 // pred_fallthru
      _
    %p40 = scmp.eq.s32.totalorder 0, 0
    // Predicated region
    $region18: #{tpu_custom_call.1} parent=1 // pred_check
      %p41 = pneg %p40
    $region19: #{tpu_custom_call.1} parent=1 // pred_check_branch
      %43 = sbr.rel (%p41) target = $region21
    $region20: #{tpu_custom_call.1} parent=1 // pred_region
      %44 = vst [vmem:[#allocation2] sm:$0xff] 0.0
      %45 = vst [vmem:[#allocation2 + $0x8] sm:$0xff] 0.0
      %46 = vst [vmem:[#allocation2 + $0x10] sm:$0xff] 0.0
      %47 = vst [vmem:[#allocation2 + $0x18] sm:$0xff] 0.0
      %48 = vst [vmem:[#allocation3] sm:$0xff] 0.0
      %49 = vst [vmem:[#allocation3 + $0x8] sm:$0xff] 0.0
      %50 = vst [vmem:[#allocation3 + $0x10] sm:$0xff] 0.0
      %51 = vst [vmem:[#allocation3 + $0x18] sm:$0xff] 0.0
      %52 = vst [vmem:[#allocation4] sm:$0xff] 0.0
      %53 = vst [vmem:[#allocation4 + $0x8] sm:$0xff] 0.0
      %54 = vst [vmem:[#allocation4 + $0x10] sm:$0xff] 0.0
      %55 = vst [vmem:[#allocation4 + $0x18] sm:$0xff] 0.0
      %56 = vst [vmem:[#allocation5] sm:$0xff] 0.0
      %57 = vst [vmem:[#allocation5 + $0x8] sm:$0xff] 0.0
      %58 = vst [vmem:[#allocation5 + $0x10] sm:$0xff] 0.0
      %59 = vst [vmem:[#allocation5 + $0x18] sm:$0xff] 0.0
    $region21: #{tpu_custom_call.1} parent=1 // pred_fallthru
      _
    %v60 = vld [vmem:[#allocation6] sm:$0xff]
    %v61 = vld [vmem:[#allocation6 + $0x8] sm:$0xff]
    %v62 = vld [vmem:[#allocation6 + $0x10] sm:$0xff]
    %v63 = vld [vmem:[#allocation6 + $0x18] sm:$0xff]
    %v64 = vld [vmem:[#allocation9] sm:$0xff]
    %v65 = vld [vmem:[#allocation9 + $0x8] sm:$0xff]
    %v66 = vld [vmem:[#allocation9 + $0x10] sm:$0xff]
    %v67 = vld [vmem:[#allocation9 + $0x18] sm:$0xff]
    %v68 = vlaneseq
    %v69 = vshrl.u32 %v68, 7
    %v70 = vlaneseq
    %v71 = vand.u32 %v70, 127
    %v72 = vadd.s32 %v71, 128
    %v73 = vadd.s32 %v71, 256
    %v74 = vadd.s32 %v71, 384
    %s75 = smul.u32 0, 8
    %v76 = vstv %s75
    %v77 = vadd.s32 %v76, %v69
    %v78 = vmul.u32 %v77, 512
    %v79 = vadd.s32 %v78, %v71
    %v80 = vadd.s32 %v78, %v72
    %v81 = vadd.s32 %v78, %v73
    %v82 = vadd.s32 %v78, %v74
    %vm83 = vcmp.lt.s32.totalorder %v79, 2048
    %vm84 = vcmp.lt.s32.totalorder %v80, 2048
    %vm85 = vcmp.lt.s32.totalorder %v81, 2048
    %vm86 = vcmp.lt.s32.totalorder %v82, 2048
    %v87 = vsel %vm83, %v60, 0.0
    %v88 = vsel %vm84, %v61, 0.0
    %v89 = vsel %vm85, %v62, 0.0
    %v90 = vsel %vm86, %v63, 0.0
    %v91 = vsel %vm83, %v64, 0.0
    %v92 = vsel %vm84, %v65, 0.0
    %v93 = vsel %vm85, %v66, 0.0
    %v94 = vsel %vm86, %v67, 0.0
    %v95 = vsub.f32 1.0, %v91
    %v96 = vsub.f32 1.0, %v92
    %v97 = vsub.f32 1.0, %v93
    %v98 = vsub.f32 1.0, %v94
    %v99 = vsel %vm83, %v95, 0.0
    %v100 = vsel %vm84, %v96, 0.0
    %v101 = vsel %vm85, %v97, 0.0
    %v102 = vsel %vm86, %v98, 0.0
    %v103 = vsub.f32 %v87, %v91
    %v104 = vsub.f32 %v88, %v92
    %v105 = vsub.f32 %v89, %v93
    %v106 = vsub.f32 %v90, %v94
    %v107 = vmul.f32 %v103, %v103
    %v108 = vmul.f32 %v104, %v104
    %v109 = vmul.f32 %v105, %v105
    %v110 = vmul.f32 %v106, %v106
    %v111 = vld [vmem:[#allocation2] sm:$0xff]
    %v112 = vld [vmem:[#allocation2 + $0x8] sm:$0xff]
    %v113 = vld [vmem:[#allocation2 + $0x10] sm:$0xff]
    %v114 = vld [vmem:[#allocation2 + $0x18] sm:$0xff]
    %v115 = vmul.f32 %v107, %v91
    %v116 = vmul.f32 %v108, %v92
    %v117 = vmul.f32 %v109, %v93
    %v118 = vmul.f32 %v110, %v94
    %v119 = vadd.f32 %v115, 0.0
    %v120 = vadd.f32 %v116, 0.0
    %v121 = vadd.f32 %v117, 0.0
    %v122 = vadd.f32 %v118, 0.0
    %v123 = vadd.f32 %v111, %v119
    %v124 = vadd.f32 %v112, %v120
    %v125 = vadd.f32 %v113, %v121
    %v126 = vadd.f32 %v114, %v122
    %127 = vst [vmem:[#allocation2] sm:$0xff] %v123
    %128 = vst [vmem:[#allocation2 + $0x8] sm:$0xff] %v124
    %129 = vst [vmem:[#allocation2 + $0x10] sm:$0xff] %v125
    %130 = vst [vmem:[#allocation2 + $0x18] sm:$0xff] %v126
    %v131 = vld [vmem:[#allocation3] sm:$0xff]
    %v132 = vld [vmem:[#allocation3 + $0x8] sm:$0xff]
    %v133 = vld [vmem:[#allocation3 + $0x10] sm:$0xff]
    %v134 = vld [vmem:[#allocation3 + $0x18] sm:$0xff]
    %v135 = vadd.f32 %v91, 0.0
    %v136 = vadd.f32 %v92, 0.0
    %v137 = vadd.f32 %v93, 0.0
    %v138 = vadd.f32 %v94, 0.0
    %v139 = vadd.f32 %v131, %v135
    %v140 = vadd.f32 %v132, %v136
    %v141 = vadd.f32 %v133, %v137
    %v142 = vadd.f32 %v134, %v138
    %143 = vst [vmem:[#allocation3] sm:$0xff] %v139
    %144 = vst [vmem:[#allocation3 + $0x8] sm:$0xff] %v140
    %145 = vst [vmem:[#allocation3 + $0x10] sm:$0xff] %v141
    %146 = vst [vmem:[#allocation3 + $0x18] sm:$0xff] %v142
    %v147 = vld [vmem:[#allocation4] sm:$0xff]
    %v148 = vld [vmem:[#allocation4 + $0x8] sm:$0xff]
    %v149 = vld [vmem:[#allocation4 + $0x10] sm:$0xff]
    %v150 = vld [vmem:[#allocation4 + $0x18] sm:$0xff]
    %v151 = vmul.f32 %v107, %v99
    %v152 = vmul.f32 %v108, %v100
    %v153 = vmul.f32 %v109, %v101
    %v154 = vmul.f32 %v110, %v102
    %v155 = vadd.f32 %v151, 0.0
    %v156 = vadd.f32 %v152, 0.0
    %v157 = vadd.f32 %v153, 0.0
    %v158 = vadd.f32 %v154, 0.0
    %v159 = vadd.f32 %v147, %v155
    %v160 = vadd.f32 %v148, %v156
    %v161 = vadd.f32 %v149, %v157
    %v162 = vadd.f32 %v150, %v158
    %163 = vst [vmem:[#allocation4] sm:$0xff] %v159
    %164 = vst [vmem:[#allocation4 + $0x8] sm:$0xff] %v160
    %165 = vst [vmem:[#allocation4 + $0x10] sm:$0xff] %v161
    %166 = vst [vmem:[#allocation4 + $0x18] sm:$0xff] %v162
    %v167 = vld [vmem:[#allocation5] sm:$0xff]
    %v168 = vld [vmem:[#allocation5 + $0x8] sm:$0xff]
    %v169 = vld [vmem:[#allocation5 + $0x10] sm:$0xff]
    %v170 = vld [vmem:[#allocation5 + $0x18] sm:$0xff]
    %v171 = vadd.f32 %v99, 0.0
    %v172 = vadd.f32 %v100, 0.0
    %v173 = vadd.f32 %v101, 0.0
    %v174 = vadd.f32 %v102, 0.0
    %v175 = vadd.f32 %v167, %v171
    %v176 = vadd.f32 %v168, %v172
    %v177 = vadd.f32 %v169, %v173
    %v178 = vadd.f32 %v170, %v174
    %179 = vst [vmem:[#allocation5] sm:$0xff] %v175
    %180 = vst [vmem:[#allocation5 + $0x8] sm:$0xff] %v176
    %181 = vst [vmem:[#allocation5 + $0x10] sm:$0xff] %v177
    %182 = vst [vmem:[#allocation5 + $0x18] sm:$0xff] %v178
    // Predicated region
    $region22: #{tpu_custom_call.1} parent=1 // pred_check
      %p183 = pneg %p40
    $region23: #{tpu_custom_call.1} parent=1 // pred_check_branch
      %185 = sbr.rel (%p183) target = $region25
    $region24: #{tpu_custom_call.1} parent=1 // pred_region
      %v186 = vld [vmem:[#allocation2] sm:$0xff]
      %v187 = vld [vmem:[#allocation2 + $0x8] sm:$0xff]
      %v188 = vld [vmem:[#allocation2 + $0x10] sm:$0xff]
      %v189 = vld [vmem:[#allocation2 + $0x18] sm:$0xff]
      %v190 = vadd.f32 %v186, %v187
      %v191 = vadd.f32 %v190, %v188
      %v192 = vadd.f32 %v191, %v189
      %193 = vadd.xlane.f32.xlu0 %v192
      %v194 = vpop.xlane.xlu0 %193
      %v195 = vrot.slane %v194, 4
      %v196 = vadd.f32 %v194, %v195
      %v197 = vrot.slane %v196, 2
      %v198 = vadd.f32 %v196, %v197
      %v199 = vrot.slane %v198, 1
      %v200 = vadd.f32 %v198, %v199
      %s201 = vtos %v200
      %v202 = vld [vmem:[#allocation3] sm:$0xff]
      %v203 = vld [vmem:[#allocation3 + $0x8] sm:$0xff]
      %v204 = vld [vmem:[#allocation3 + $0x10] sm:$0xff]
      %v205 = vld [vmem:[#allocation3 + $0x18] sm:$0xff]
      %v206 = vadd.f32 %v202, %v203
      %v207 = vadd.f32 %v206, %v204
      %v208 = vadd.f32 %v207, %v205
      %209 = vadd.xlane.f32.xlu0 %v208
      %v210 = vpop.xlane.xlu0 %209
      %v211 = vrot.slane %v210, 4
      %v212 = vadd.f32 %v210, %v211
      %v213 = vrot.slane %v212, 2
      %v214 = vadd.f32 %v212, %v213
      %v215 = vrot.slane %v214, 1
      %v216 = vadd.f32 %v214, %v215
      %s217 = vtos %v216
      %s218 = sadd.f32 %s217, 1e-05
      %v219 = vstv %s218
      %v220 = vrcp.pop %v219
      %v221 = vmul.f32 %v219, %v220
      %v222 = vsub.f32 1.0, %v221
      %v223 = vmul.f32 %v220, %v222
      %v224 = vadd.f32 %v220, %v223
      %vm225 = vweird.f32 %v219
      %vm226 = vweird.f32 %v220
      %vm227 = vmor %vm225, %vm226
      %v228 = vsel %vm227, %v220, %v224
      %v229 = vand.u32 2147483647, %v219
      %vm230 = vcmp.eq.f32.partialorder %v229, 8.507059e+37
      %v231 = vand.u32 %v219, 2147483648
      %v232 = vor.u32 1.1754944e-38, %v231
      %v233 = vsel %vm230, %v232, %v228
      %s234 = vtos %v233
      %s235 = smul.f32 %s201, %s234
      %v236 = vld [vmem:[#allocation4] sm:$0xff]
      %v237 = vld [vmem:[#allocation4 + $0x8] sm:$0xff]
      %v238 = vld [vmem:[#allocation4 + $0x10] sm:$0xff]
      %v239 = vld [vmem:[#allocation4 + $0x18] sm:$0xff]
      %v240 = vadd.f32 %v236, %v237
      %v241 = vadd.f32 %v240, %v238
      %v242 = vadd.f32 %v241, %v239
      %243 = vadd.xlane.f32.xlu0 %v242
      %v244 = vpop.xlane.xlu0 %243
      %v245 = vrot.slane %v244, 4
      %v246 = vadd.f32 %v244, %v245
      %v247 = vrot.slane %v246, 2
      %v248 = vadd.f32 %v246, %v247
      %v249 = vrot.slane %v248, 1
      %v250 = vadd.f32 %v248, %v249
      %s251 = vtos %v250
      %v252 = vld [vmem:[#allocation5] sm:$0xff]
      %v253 = vld [vmem:[#allocation5 + $0x8] sm:$0xff]
      %v254 = vld [vmem:[#allocation5 + $0x10] sm:$0xff]
      %v255 = vld [vmem:[#allocation5 + $0x18] sm:$0xff]
      %v256 = vadd.f32 %v252, %v253
      %v257 = vadd.f32 %v256, %v254
      %v258 = vadd.f32 %v257, %v255
      %259 = vadd.xlane.f32.xlu0 %v258
      %v260 = vpop.xlane.xlu0 %259
      %v261 = vrot.slane %v260, 4
      %v262 = vadd.f32 %v260, %v261
      %v263 = vrot.slane %v262, 2
      %v264 = vadd.f32 %v262, %v263
      %v265 = vrot.slane %v264, 1
      %v266 = vadd.f32 %v264, %v265
      %s267 = vtos %v266
      %s268 = sadd.f32 %s267, 1e-05
      %v269 = vstv %s268
      %v270 = vrcp.pop %v269
      %v271 = vmul.f32 %v269, %v270
      %v272 = vsub.f32 1.0, %v271
      %v273 = vmul.f32 %v270, %v272
      %v274 = vadd.f32 %v270, %v273
      %vm275 = vweird.f32 %v269
      %vm276 = vweird.f32 %v270
      %vm277 = vmor %vm275, %vm276
      %v278 = vsel %vm277, %v270, %v274
      %v279 = vand.u32 2147483647, %v269
      %vm280 = vcmp.eq.f32.partialorder %v279, 8.507059e+37
      %v281 = vand.u32 %v269, 2147483648
      %v282 = vor.u32 1.1754944e-38, %v281
      %v283 = vsel %vm280, %v282, %v278
      %s284 = vtos %v283
      %s285 = smul.f32 %s251, %s284
      %s286 = smul.f32 %s235, 0.6
      %s287 = smul.f32 %s285, 0.4
      %s288 = sadd.f32 %s286, %s287
      %s289 = scalar_lea.smem [#allocation11], 0
      %290 = sst [smem:[%s289]] %s288
    $region25: #{tpu_custom_call.1} parent=1 // pred_fallthru
      _
    // Predicated region
    $region26: #{tpu_custom_call.1} parent=1 // pred_check
      _
    $region27: #{tpu_custom_call.1} parent=1 // pred_check_branch
      %292 = sbr.rel (0) target = $region29
    $region28: #{tpu_custom_call.1} parent=1 // pred_region
      %294 = vsyncadd [#allocation8], 0
      %s296 = sshll.u32 %s2, 4
      %s297 = int_to_ptr.hbm [resolvable:$true] %s296
      %299 = dma.smem_to_hbm [#allocation11], 16, %s297, [#allocation8]
    $region29: #{tpu_custom_call.1} parent=1 // pred_fallthru
      _
    // Predicated region
    $region30: #{tpu_custom_call.1} parent=1 // pred_check
      _
    $region31: #{tpu_custom_call.1} parent=1 // pred_check_branch
      %301 = sbr.rel (0) target = $region33
    $region32: #{tpu_custom_call.1} parent=1 // pred_region
      %303 = dma.done [#allocation8], 16
    $region33: #{tpu_custom_call.1} parent=1 // pred_fallthru
      _
    %304 = sfence
    %305 = vsyncpa [#allocation7], 1
    %306 = vsyncpa [#allocation10], 1
    %307 = vsyncpa [#allocation8], 1

</llo_original>
